<compile_context>
chip_gen: v7x
topology: tpu7x:2x2x1
jax: 0.10.0
libtpu: 0.0.40
codegen_flags: <defaults>
</compile_context>

<pallas_src>
import jax
import jax.numpy as jnp
from jax.experimental import pallas as pl
from jax.experimental.pallas import tpu as pltpu

_LANE = 128
_SUBLANE = 8
# 4 streams (mu, log_var, eps, out) x 2 pipeline buffers x 1024*128*4 B = 4 MiB
# of VMEM: comfortably inside the default scoped limit on v5e/v6e/v7x.
_MAX_TILE_ROWS = 1024


def _sampling_kernel(mu_ref, logvar_ref, eps_ref, out_ref):
    # std = sqrt(exp(log_var)) == exp(0.5 * log_var): single EUP op, overflow-safe.
    std = jnp.exp(0.5 * logvar_ref[...])
    out_ref[...] = mu_ref[...] + std * eps_ref[...]


def sampling(mu: jax.Array, log_var: jax.Array, key: jax.Array) -> jax.Array:
    """z = mu + exp(0.5 * log_var) * epsilon,  epsilon ~ N(0, 1)."""
    assert mu.shape == log_var.shape and mu.dtype == log_var.dtype
    B, D = mu.shape

    # epsilon ~ N(0, 1): drawn with the JAX PRNG (tiling-invariant, lowers on
    # every backend) and streamed through the kernel like mu / log_var.
    # TODO(synk): draw eps on-chip via pltpu.prng_seed/stateful_normal (saves
    # one HBM input stream) once the target environment lowers the TPU PRNG.
    eps = jax.random.normal(key, mu.shape, dtype=mu.dtype)

    # Lane-dense plumbing: flatten (B, D) -> (rows, 128) when possible so
    # stores are full-lane unmasked vst's.  Elementwise math is layout-agnostic.
    total = B * D
    if total % _LANE == 0:
        rows, cols = total // _LANE, _LANE
    else:
        rows, cols = B, D
    mu2 = mu.reshape(rows, cols)
    lv2 = log_var.reshape(rows, cols)
    eps2 = eps.reshape(rows, cols)

    # Tile the row axis (multiple of 8) so the pipeline double-buffers; fall
    # back to one full-array block when rows is not sublane-aligned.
    if rows % _SUBLANE == 0:
        tb = min(rows, _MAX_TILE_ROWS)
    else:
        tb = rows
    grid = (pl.cdiv(rows, tb),)

    spec = pl.BlockSpec((tb, cols), lambda i: (i, 0))
    out = pl.pallas_call(
        _sampling_kernel,
        out_shape=jax.ShapeDtypeStruct((rows, cols), mu.dtype),
        grid_spec=pltpu.PrefetchScalarGridSpec(
            num_scalar_prefetch=0,
            grid=grid,
            in_specs=[spec, spec, spec],   # mu, log_var, eps
            out_specs=spec,
        ),
        compiler_params=pltpu.CompilerParams(
            dimension_semantics=("parallel",),   # embarrassingly parallel rows
        ),
    )(mu2, lv2, eps2)
    return out.reshape(B, D)


if __name__ == "__main__":
    key = jax.random.PRNGKey(0)
    k_mu, k_lv, k_eps = jax.random.split(key, 3)

    # Small latent consistent with the module: batch=8, latent_dim=128.
    B, D = 8, 128
    mu = jax.random.normal(k_mu, (B, D), dtype=jnp.float32)
    # Keep log_var in a sane range so std = exp(0.5*log_var) is well-behaved.
    log_var = 0.1 * jax.random.normal(k_lv, (B, D), dtype=jnp.float32)

    z = sampling(mu, log_var, k_eps)
    jax.block_until_ready(z)

    # Reference (same epsilon drawn from the same key).
    eps = jax.random.normal(k_eps, (B, D), dtype=jnp.float32)
    z_ref = mu + jnp.exp(0.5 * log_var) * eps

    assert z.shape == mu.shape and z.dtype == mu.dtype
    assert bool(jnp.all(jnp.isfinite(z)))
    assert float(jnp.max(jnp.abs(z - mu))) > 0.0          # noise was injected
    assert bool(jnp.allclose(z, z_ref, atol=1e-6, rtol=1e-6))

    print("KERNEL_OK")
</pallas_src>

<mosaic_0001>
module attributes {stable_mosaic.version = 11 : i64} {
  func.func @_sampling_kernel(%arg0: i32, %arg1: memref<8x128xf32, #tpu.memory_space<vmem>>, %arg2: memref<8x128xf32, #tpu.memory_space<vmem>>, %arg3: memref<8x128xf32, #tpu.memory_space<vmem>>, %arg4: memref<8x128xf32, #tpu.memory_space<vmem>>) attributes {dimension_semantics = [#tpu.dimension_semantics<parallel>], iteration_bounds = array<i64: 1>, scalar_prefetch = 0 : i64, scratch_operands = 0 : i64, tpu.core_type = #tpu.core_type<tc>, window_params = [{transform_indices = @transform_0, window_bounds = array<i64: 8, 128>}, {transform_indices = @transform_1, window_bounds = array<i64: 8, 128>}, {transform_indices = @transform_2, window_bounds = array<i64: 8, 128>}, {transform_indices = @transform_3, window_bounds = array<i64: 8, 128>}]} {
    %c0 = arith.constant 0 : index
    %c0_0 = arith.constant 0 : index
    %0 = vector.load %arg2[%c0, %c0_0] : memref<8x128xf32, #tpu.memory_space<vmem>>, vector<8x128xf32>
    %cst = arith.constant 5.000000e-01 : f32
    %1 = vector.broadcast %cst : f32 to vector<8x128xf32>
    %2 = arith.mulf %1, %0 : vector<8x128xf32>
    %3 = math.exp %2 : vector<8x128xf32>
    %c0_1 = arith.constant 0 : index
    %c0_2 = arith.constant 0 : index
    %4 = vector.load %arg1[%c0_1, %c0_2] : memref<8x128xf32, #tpu.memory_space<vmem>>, vector<8x128xf32>
    %c0_3 = arith.constant 0 : index
    %c0_4 = arith.constant 0 : index
    %5 = vector.load %arg3[%c0_3, %c0_4] : memref<8x128xf32, #tpu.memory_space<vmem>>, vector<8x128xf32>
    %6 = arith.mulf %3, %5 : vector<8x128xf32>
    %7 = arith.addf %4, %6 : vector<8x128xf32>
    %c0_5 = arith.constant 0 : index
    %c0_6 = arith.constant 0 : index
    %8 = vector.load %arg4[%c0_5, %c0_6] : memref<8x128xf32, #tpu.memory_space<vmem>>, vector<8x128xf32>
    tpu.vector_store %arg4[%c0_5, %c0_6], %7 {strides = array<i32>} : memref<8x128xf32, #tpu.memory_space<vmem>>, vector<8x128xf32>,
    return
  }
  func.func @transform_0(%arg0: i32) -> (i32, i32) {
    %c0_i32 = arith.constant 0 : i32
    %c0_i32_0 = arith.constant 0 : i32
    return %arg0, %c0_i32 : i32, i32
  }
  func.func @transform_1(%arg0: i32) -> (i32, i32) {
    %c0_i32 = arith.constant 0 : i32
    %c0_i32_0 = arith.constant 0 : i32
    return %arg0, %c0_i32 : i32, i32
  }
  func.func @transform_2(%arg0: i32) -> (i32, i32) {
    %c0_i32 = arith.constant 0 : i32
    %c0_i32_0 = arith.constant 0 : i32
    return %arg0, %c0_i32 : i32, i32
  }
  func.func @transform_3(%arg0: i32) -> (i32, i32) {
    %c0_i32 = arith.constant 0 : i32
    %c0_i32_0 = arith.constant 0 : i32
    return %arg0, %c0_i32 : i32, i32
  }
}

</mosaic_0001>

<llo_original>
// kernel: tpu_custom_call.1
$region0: #{tpu_custom_call.1}
  #allocation0 [shape = 'u32[]', space=smem, size = 0x4, offset = 0x4, fixed_abs, tag = 'smem constant byte address 0x4 - core index']
  #allocation1 [shape = 'u32[144,128]{1,0:T(1,128)}', space=vmem, size = 0x12000, scoped, tag = 'internal scratch']
  %s0 = inlined_call_operand.hbm [shape: f32[8,128], index: 0, kind: input, shape index: {}]
  %s1 = inlined_call_operand.hbm [shape: f32[8,128], index: 1, kind: input, shape index: {}]
  %s2 = inlined_call_operand.hbm [shape: f32[8,128], index: 2, kind: input, shape index: {}]
  %s3 = inlined_call_operand.hbm [shape: f32[8,128], index: 3, kind: output, shape index: {}]
  %s4 = sld [smem:[#allocation0]]
  $region34: #{tpu_custom_call.1} parent=0
    _
  %s6 = ssub.s32 1, %s4
  %s7 = scalar_select 0, %s6, %s4
  $region1: #{tpu_custom_call.1} parent=0
    #allocation2 [shape = 'u8[4096]{0}', space=vmem, size = 0x1000, scoped, tag = 'input window, operand 0, single buffered']
    #allocation3 [shape = 's32[1]{0}', space=sflag, size = 0x4, scoped, tag = 'scoped memory for tpu_custom_call.1']
    #allocation4 [shape = 's32[1]{0}', space=sflag, size = 0x4, scoped, tag = 'scoped memory for tpu_custom_call.1']
    #allocation5 [shape = 'u8[4096]{0}', space=vmem, size = 0x1000, scoped, tag = 'input window, operand 1, single buffered']
    #allocation6 [shape = 's32[1]{0}', space=sflag, size = 0x4, scoped, tag = 'scoped memory for tpu_custom_call.1']
    #allocation7 [shape = 'u8[4096]{0}', space=vmem, size = 0x1000, scoped, tag = 'input window, operand 2, single buffered']
    #allocation8 [shape = 'u8[4096]{0}', space=vmem, size = 0x1000, scoped, tag = 'output window, operand 0, single buffered']
    %8 = vsyncpa [#allocation3], 0
    %9 = vsyncpa [#allocation6], 0
    %10 = vsyncpa [#allocation4], 0
    // Predicated region
    $region2: #{tpu_custom_call.1} parent=1 // pred_check
      _
    $region3: #{tpu_custom_call.1} parent=1 // pred_check_branch
      %12 = sbr.rel (0) target = $region5
    $region4: #{tpu_custom_call.1} parent=1 // pred_region
      %s14 = ssub.s32 128, 128
      %15 = vsyncadd [#allocation3], %s14
      %s17 = sshll.u32 [#allocation2], 4
      %s18 = int_to_ptr.vmem [resolvable:$true] %s17
      %20 = dma.hbm_to_vmem [thread:$0]  %s0, 128, %s18, [#allocation3]
    $region5: #{tpu_custom_call.1} parent=1 // pred_fallthru
      _
    // Predicated region
    $region6: #{tpu_custom_call.1} parent=1 // pred_check
      _
    $region7: #{tpu_custom_call.1} parent=1 // pred_check_branch
      %22 = sbr.rel (0) target = $region9
    $region8: #{tpu_custom_call.1} parent=1 // pred_region
      %s24 = ssub.s32 128, 128
      %25 = vsyncadd [#allocation6], %s24
      %s27 = sshll.u32 [#allocation5], 4
      %s28 = int_to_ptr.vmem [resolvable:$true] %s27
      %30 = dma.hbm_to_vmem [thread:$0]  %s1, 128, %s28, [#allocation6]
    $region9: #{tpu_custom_call.1} parent=1 // pred_fallthru
      _
    // Predicated region
    $region10: #{tpu_custom_call.1} parent=1 // pred_check
      _
    $region11: #{tpu_custom_call.1} parent=1 // pred_check_branch
      %32 = sbr.rel (0) target = $region13
    $region12: #{tpu_custom_call.1} parent=1 // pred_region
      %s34 = ssub.s32 128, 128
      %35 = vsyncadd [#allocation6], %s34
      %s37 = sshll.u32 [#allocation7], 4
      %s38 = int_to_ptr.vmem [resolvable:$true] %s37
      %40 = dma.hbm_to_vmem [thread:$0]  %s2, 128, %s38, [#allocation6]
    $region13: #{tpu_custom_call.1} parent=1 // pred_fallthru
      _
    // Predicated region
    $region14: #{tpu_custom_call.1} parent=1 // pred_check
      _
    $region15: #{tpu_custom_call.1} parent=1 // pred_check_branch
      %42 = sbr.rel (0) target = $region17
    $region16: #{tpu_custom_call.1} parent=1 // pred_region
      %43 = dma.done [#allocation3], 128
    $region17: #{tpu_custom_call.1} parent=1 // pred_fallthru
      _
    // Predicated region
    $region18: #{tpu_custom_call.1} parent=1 // pred_check
      _
    $region19: #{tpu_custom_call.1} parent=1 // pred_check_branch
      %45 = sbr.rel (0) target = $region21
    $region20: #{tpu_custom_call.1} parent=1 // pred_region
      %46 = dma.done [#allocation6], 128
    $region21: #{tpu_custom_call.1} parent=1 // pred_fallthru
      _
    // Predicated region
    $region22: #{tpu_custom_call.1} parent=1 // pred_check
      _
    $region23: #{tpu_custom_call.1} parent=1 // pred_check_branch
      %48 = sbr.rel (0) target = $region25
    $region24: #{tpu_custom_call.1} parent=1 // pred_region
      %49 = dma.done [#allocation6], 128
    $region25: #{tpu_custom_call.1} parent=1 // pred_fallthru
      _
    %v50 = vld [vmem:[#allocation5] sm:$0xff]
    %v51 = vmul.f32 %v50, 0.5
    %v52 = vmul.f32 %v51, 1.442695
    %v53 = vpow.pop %v52
    %v54 = vld [vmem:[#allocation2] sm:$0xff]
    %v55 = vld [vmem:[#allocation7] sm:$0xff]
    %v56 = vmul.f32 %v53, %v55
    %v57 = vadd.f32 %v54, %v56
    %58 = vst [vmem:[#allocation8] sm:$0xff] %v57
    // Predicated region
    $region26: #{tpu_custom_call.1} parent=1 // pred_check
      _
    $region27: #{tpu_custom_call.1} parent=1 // pred_check_branch
      %60 = sbr.rel (0) target = $region29
    $region28: #{tpu_custom_call.1} parent=1 // pred_region
      %s62 = ssub.s32 128, 128
      %63 = vsyncadd [#allocation4], %s62
      %s65 = sshll.u32 [#allocation8], 4
      %s66 = int_to_ptr.vmem [resolvable:$true] %s65
      %68 = dma.vmem_to_hbm [thread:$0]  %s66, 128, %s3, [#allocation4]
    $region29: #{tpu_custom_call.1} parent=1 // pred_fallthru
      _
    // Predicated region
    $region30: #{tpu_custom_call.1} parent=1 // pred_check
      _
    $region31: #{tpu_custom_call.1} parent=1 // pred_check_branch
      %70 = sbr.rel (0) target = $region33
    $region32: #{tpu_custom_call.1} parent=1 // pred_region
      %71 = dma.done [#allocation4], 128
    $region33: #{tpu_custom_call.1} parent=1 // pred_fallthru
      _
    %72 = vsyncpa [#allocation3], 1
    %73 = vsyncpa [#allocation6], 1
    %74 = vsyncpa [#allocation4], 1

</llo_original>
